<compile_context>
chip_gen: v5e
topology: v5e:2x2
jax: 0.10.0
libtpu: 0.0.40
codegen_flags: <defaults>
</compile_context>

<pallas_src>
import functools

import jax
import jax.numpy as jnp
from jax import lax
from jax.experimental import pallas as pl
from jax.experimental.pallas import tpu as pltpu


def _round_up(a: int, b: int) -> int:
    return ((a + b - 1) // b) * b


def _cdiv(a: int, b: int) -> int:
    return (a + b - 1) // b


# contract the last dim of both operands: A (M, K) x B (N, K) -> (M, N)
_NT = (((1,), (1,)), ((), ()))


def _split_bf16(v):
    """Split an f32 array into hi/lo bf16 parts with v ~= hi + lo."""
    hi = v.astype(jnp.bfloat16)
    lo = (v - hi.astype(jnp.float32)).astype(jnp.bfloat16)
    return hi, lo


def _dot_nt(a, b):
    return lax.dot_general(a, b, _NT, preferred_element_type=jnp.float32)


# --------------------------------------------------------------------------
# Phase 1: per-batch-tile q (stored transposed, compact) + per-core partial f.
# --------------------------------------------------------------------------
def _q_kernel(x_ref, mu_ref, mu_sq_ref, q_ref, f_ref, *,
              n_clusters, batch, tile_b, n_tiles, tiles_per_core):
    c = pl.program_id(0)   # core chunk ("parallel": split across v7x TCs)
    i = pl.program_id(1)   # batch tile within the chunk ("arbitrary")

    @pl.when(i == 0)
    def _():               # fresh per-core partial-f accumulator
        f_ref[...] = jnp.zeros_like(f_ref)

    x = x_ref[...]         # (TB, D)  f32
    mu = mu_ref[...]       # (CP, D)  f32, rows >= n_clusters are zero

    # cross[c, t] = mu_c . x_t directly in (CP, TB) orientation on the MXU.
    # Compensated bf16 hi/lo products -> ~f32 accuracy with native MXU dtypes.
    x_hi, x_lo = _split_bf16(x)
    mu_hi, mu_lo = _split_bf16(mu)
    cross = _dot_nt(mu_hi, x_hi) + _dot_nt(mu_hi, x_lo) + _dot_nt(mu_lo, x_hi)

    # |x_t|^2 broadcast over the CP rows, also via the MXU (ones . (x*x)^T).
    x2 = x * x
    x2_hi, x2_lo = _split_bf16(x2)
    ones = jnp.ones(mu.shape, jnp.bfloat16)
    x_sq = _dot_nt(ones, x2_hi) + _dot_nt(ones, x2_lo)

    # |z_i - mu_j|^2 = |mu_j|^2 + |z_i|^2 - 2 z_i.mu_j   (clamped at 0)
    d2 = jnp.maximum(mu_sq_ref[...] + x_sq - 2.0 * cross, 0.0)   # (CP, TB)
    d3 = 1.0 / (1.0 + d2[:n_clusters])                           # (C, TB)
    q = d3 / jnp.sum(d3, axis=0, keepdims=True)                  # exact normalize
    q_ref[...] = q

    # f_j += sum_i q_ij, masking ragged batch columns and the duplicated tile
    # that the clamped core split produces when n_tiles doesn't divide evenly.
    t_raw = c * tiles_per_core + i
    t = jnp.minimum(t_raw, n_tiles - 1)
    col = t * tile_b + lax.broadcasted_iota(jnp.int32, (1, tile_b), 1)
    valid = jnp.logical_and(col < batch, t_raw < n_tiles)         # (1, TB)
    f_ref[...] += jnp.sum(jnp.where(valid, q, 0.0), axis=1, keepdims=True)[None]


# --------------------------------------------------------------------------
# Phase 2: p from the compact q tiles and the completed f (fully parallel).
# --------------------------------------------------------------------------
def _p_kernel(q_ref, f_ref, p_ref):
    q = q_ref[...]                               # (C, TB)
    p_un = (q * q) / f_ref[...]                  # (C, TB) / (C, 1), exact
    p_ref[...] = p_un / jnp.sum(p_un, axis=0, keepdims=True)


def last_model_forward(x, cluster_centers, *, max_tile_batch=8192):
    """DEC soft-clustering forward.

    x:               (batch, latent_dim) float32
    cluster_centers: (n_clusters, latent_dim) float32
    returns (p_ij (B, C), q_ij (B, C), f_j (C,)) -- same as the PyTorch module.
    """
    x = jnp.asarray(x, jnp.float32)
    mu = jnp.asarray(cluster_centers, jnp.float32)
    B, D = x.shape
    C, D2 = mu.shape
    assert D == D2 and C >= 1

    CP = _round_up(C, 8)              # sublane-padded cluster dim (compute only)

    # Batch tile: the whole batch if it fits one sub-128-lane tile, otherwise a
    # multiple of 128 lanes that never exceeds B (ragged edges handled by
    # masking; no padded copy of x is materialized).
    if B <= 128:
        TB = B
    else:
        TB = min(_round_up(max_tile_batch, 128), (B // 128) * 128)
    NB = _cdiv(B, TB)                 # number of batch tiles
    NC = 2 if NB >= 2 else 1          # megacore split on v7x; harmless on 1-TC chips
    NBc = _cdiv(NB, NC)               # tiles per core chunk

    # Batch-invariant layout prep (tiny, done once):
    mu_pad = jnp.zeros((CP, D), jnp.float32).at[:C].set(mu)
    mu_sq = jnp.zeros((CP, 1), jnp.float32).at[:C, 0].set(jnp.sum(mu * mu, axis=1))

    def x_map(c, i):
        return (jnp.minimum(c * NBc + i, NB - 1), 0)

    def q_map(c, i):
        return (0, jnp.minimum(c * NBc + i, NB - 1))

    # ---- phase 1: q (C, B) + per-core partial f (NC, C, 1) -----------------
    q_cb, f_part = pl.pallas_call(
        functools.partial(_q_kernel, n_clusters=C, batch=B, tile_b=TB,
                          n_tiles=NB, tiles_per_core=NBc),
        out_shape=(
            jax.ShapeDtypeStruct((C, B), jnp.float32),     # q, transposed/compact
            jax.ShapeDtypeStruct((NC, C, 1), jnp.float32), # per-core partial f
        ),
        grid_spec=pltpu.PrefetchScalarGridSpec(
            num_scalar_prefetch=0,
            grid=(NC, NBc),
            in_specs=[
                pl.BlockSpec((TB, D), x_map),
                pl.BlockSpec((CP, D), lambda c, i: (0, 0)),
                pl.BlockSpec((CP, 1), lambda c, i: (0, 0)),
            ],
            out_specs=[
                pl.BlockSpec((C, TB), q_map),
                pl.BlockSpec((1, C, 1), lambda c, i: (c, 0, 0)),  # resident per core
            ],
        ),
        compiler_params=pltpu.CompilerParams(
            dimension_semantics=("parallel", "arbitrary")),
        cost_estimate=pl.CostEstimate(
            flops=10 * NB * TB * CP * D + 30 * NB * TB * C,
            transcendentals=NB * TB * C,
            bytes_accessed=4 * (NB * TB * D + NB * TB * C + CP * D + CP + NC * C)),
    )(x, mu_pad, mu_sq)

    f_full = jnp.sum(f_part, axis=0)              # (C, 1): sum per-core partials

    # ---- phase 2: p from compact q tiles + the finished f ------------------
    p_cb = pl.pallas_call(
        _p_kernel,
        out_shape=jax.ShapeDtypeStruct((C, B), jnp.float32),
        grid_spec=pltpu.PrefetchScalarGridSpec(
            num_scalar_prefetch=0,
            grid=(NB,),
            in_specs=[
                pl.BlockSpec((C, TB), lambda i: (0, i)),
                pl.BlockSpec((C, 1), lambda i: (0, 0)),
            ],
            out_specs=pl.BlockSpec((C, TB), lambda i: (0, i)),
        ),
        compiler_params=pltpu.CompilerParams(
            dimension_semantics=("parallel",)),
        cost_estimate=pl.CostEstimate(
            flops=6 * NB * TB * C,
            transcendentals=NB * TB * C,
            bytes_accessed=4 * (2 * NB * TB * C + C)),
    )(q_cb, f_full)

    # tiny (C, B) -> (B, C) transposes; no fat padded slabs are sliced anymore
    return p_cb.T, q_cb.T, f_full[:, 0]


def _reference(x, mu):
    # pure-JAX mirror of the PyTorch forward (exact math)
    d1 = jnp.sqrt(jnp.maximum(
        jnp.sum((x[:, None, :] - mu[None, :, :]) ** 2, axis=-1), 0.0))
    d2 = d1 ** 2 + 1.0
    d3 = 1.0 / d2
    q = d3 / jnp.sum(d3, axis=1, keepdims=True)
    f = jnp.sum(q, axis=0)
    p = q ** 2 / f[None, :]
    p = p / jnp.sum(p, axis=1, keepdims=True)
    return p, q, f


def _check(x, mu, **kw):
    p, q, f = last_model_forward(x, mu, **kw)
    jax.block_until_ready((p, q, f))
    p_r, q_r, f_r = _reference(x, mu)
    assert p.shape == p_r.shape and q.shape == q_r.shape and f.shape == f_r.shape
    # Exact-division normalization + compensated bf16 matmuls -> tight tolerance
    # (previous version needed 1e-2 because of approx reciprocals).
    assert jnp.allclose(q, q_r, atol=5e-4, rtol=5e-4), "q mismatch"
    assert jnp.allclose(p, p_r, atol=5e-4, rtol=5e-4), "p mismatch"
    assert jnp.allclose(f, f_r, atol=5e-3, rtol=5e-4), "f mismatch"


if __name__ == "__main__":
    n_clusters = 3
    latent_dim = 32

    key = jax.random.PRNGKey(0)
    k_mu, k1, k2, k3, k4 = jax.random.split(key, 5)

    # deterministic synthetic "KMeans" cluster centers (no sklearn / checkpoint)
    # TODO(synk): KMeans fitting itself is outside this module; centers are random here.
    cluster_centers = jax.random.normal(
        k_mu, (n_clusters, latent_dim), dtype=jnp.float32)

    # single-tile cases (full batch fits one lane tile)
    _check(jax.random.normal(k1, (8, latent_dim), jnp.float32), cluster_centers)
    _check(jax.random.normal(k2, (20, latent_dim), jnp.float32), cluster_centers)

    # multi-tile: exercises f accumulation, the 2-way (megacore-style) core
    # split with a clamped duplicated tail tile, and exact tile division.
    _check(jax.random.normal(k3, (384, latent_dim), jnp.float32),
           cluster_centers, max_tile_batch=128)

    # ragged multi-tile: last tile only partially valid (col < batch masking,
    # masked ragged writeback), no padded copy of x.
    _check(jax.random.normal(k4, (300, latent_dim), jnp.float32),
           cluster_centers, max_tile_batch=128)

    print("KERNEL_OK")
</pallas_src>

<mosaic_0001>
module attributes {stable_mosaic.version = 11 : i64} {
  func.func @_q_kernel(%arg0: i32, %arg1: i32, %arg2: memref<8x32xf32, #tpu.memory_space<vmem>>, %arg3: memref<8x32xf32, #tpu.memory_space<vmem>>, %arg4: memref<8x1xf32, #tpu.memory_space<vmem>>, %arg5: memref<3x8xf32, #tpu.memory_space<vmem>>, %arg6: memref<1x3x1xf32, #tpu.memory_space<vmem>>) attributes {dimension_semantics = [#tpu.dimension_semantics<parallel>, #tpu.dimension_semantics<arbitrary>], iteration_bounds = array<i64: 1, 1>, scalar_prefetch = 0 : i64, scratch_operands = 0 : i64, tpu.core_type = #tpu.core_type<tc>, window_params = [{transform_indices = @transform_0, window_bounds = array<i64: 8, 32>}, {pipeline_mode = #tpu.pipeline_mode<synchronous>, transform_indices = @transform_1, window_bounds = array<i64: 8, 32>}, {pipeline_mode = #tpu.pipeline_mode<synchronous>, transform_indices = @transform_2, window_bounds = array<i64: 8, 1>}, {transform_indices = @transform_3, window_bounds = array<i64: 3, 8>}, {transform_indices = @transform_4, window_bounds = array<i64: 1, 3, 1>}]} {
    %c0_i32 = arith.constant 0 : i32
    %0 = arith.cmpi eq, %arg1, %c0_i32 : i32
    %1 = arith.extui %0 : i1 to i32
    %c0_i32_0 = arith.constant 0 : i32
    %2 = arith.cmpi ne, %1, %c0_i32_0 : i32
    scf.if %2 {
      %cst_29 = arith.constant 0.000000e+00 : f32
      %67 = vector.broadcast %cst_29 : f32 to vector<1x3x1xf32>
      %c0_30 = arith.constant 0 : index
      %c0_31 = arith.constant 0 : index
      %c0_32 = arith.constant 0 : index
      %68 = vector.load %arg6[%c0_30, %c0_31, %c0_32] : memref<1x3x1xf32, #tpu.memory_space<vmem>>, vector<1x3x1xf32>
      tpu.vector_store %arg6[%c0_30, %c0_31, %c0_32], %67 {strides = array<i32>} : memref<1x3x1xf32, #tpu.memory_space<vmem>>, vector<1x3x1xf32>,
    } else {
    }
    %c0 = arith.constant 0 : index
    %c0_1 = arith.constant 0 : index
    %3 = vector.load %arg2[%c0, %c0_1] : memref<8x32xf32, #tpu.memory_space<vmem>>, vector<8x32xf32>
    %c0_2 = arith.constant 0 : index
    %c0_3 = arith.constant 0 : index
    %4 = vector.load %arg3[%c0_2, %c0_3] : memref<8x32xf32, #tpu.memory_space<vmem>>, vector<8x32xf32>
    %5 = arith.truncf %3 : vector<8x32xf32> to vector<8x32xbf16>
    %6 = arith.extf %5 : vector<8x32xbf16> to vector<8x32xf32>
    %7 = arith.subf %3, %6 : vector<8x32xf32>
    %8 = arith.truncf %7 : vector<8x32xf32> to vector<8x32xbf16>
    %9 = arith.truncf %4 : vector<8x32xf32> to vector<8x32xbf16>
    %10 = arith.extf %9 : vector<8x32xbf16> to vector<8x32xf32>
    %11 = arith.subf %4, %10 : vector<8x32xf32>
    %12 = arith.truncf %11 : vector<8x32xf32> to vector<8x32xbf16>
    %cst = arith.constant dense<0.000000e+00> : vector<8x8xf32>
    %13 = tpu.matmul %9, %5, %cst {dimension_numbers = #tpu.dot_dimension_numbers<[1], [1], [0], [0], [0, 0, 1, 0], [], []>} : vector<8x32xbf16>, vector<8x32xbf16>, vector<8x8xf32> -> vector<8x8xf32>
    %cst_4 = arith.constant dense<0.000000e+00> : vector<8x8xf32>
    %14 = tpu.matmul %9, %8, %cst_4 {dimension_numbers = #tpu.dot_dimension_numbers<[1], [1], [0], [0], [0, 0, 1, 0], [], []>} : vector<8x32xbf16>, vector<8x32xbf16>, vector<8x8xf32> -> vector<8x8xf32>
    %15 = arith.addf %13, %14 : vector<8x8xf32>
    %cst_5 = arith.constant dense<0.000000e+00> : vector<8x8xf32>
    %16 = tpu.matmul %12, %5, %cst_5 {dimension_numbers = #tpu.dot_dimension_numbers<[1], [1], [0], [0], [0, 0, 1, 0], [], []>} : vector<8x32xbf16>, vector<8x32xbf16>, vector<8x8xf32> -> vector<8x8xf32>
    %17 = arith.addf %15, %16 : vector<8x8xf32>
    %18 = arith.mulf %3, %3 : vector<8x32xf32>
    %19 = arith.truncf %18 : vector<8x32xf32> to vector<8x32xbf16>
    %20 = arith.extf %19 : vector<8x32xbf16> to vector<8x32xf32>
    %21 = arith.subf %18, %20 : vector<8x32xf32>
    %22 = arith.truncf %21 : vector<8x32xf32> to vector<8x32xbf16>
    %cst_6 = arith.constant 1.000000e+00 : bf16
    %23 = vector.broadcast %cst_6 : bf16 to vector<8x32xbf16>
    %cst_7 = arith.constant dense<0.000000e+00> : vector<8x8xf32>
    %24 = tpu.matmul %23, %19, %cst_7 {dimension_numbers = #tpu.dot_dimension_numbers<[1], [1], [0], [0], [0, 0, 1, 0], [], []>} : vector<8x32xbf16>, vector<8x32xbf16>, vector<8x8xf32> -> vector<8x8xf32>
    %cst_8 = arith.constant dense<0.000000e+00> : vector<8x8xf32>
    %25 = tpu.matmul %23, %22, %cst_8 {dimension_numbers = #tpu.dot_dimension_numbers<[1], [1], [0], [0], [0, 0, 1, 0], [], []>} : vector<8x32xbf16>, vector<8x32xbf16>, vector<8x8xf32> -> vector<8x8xf32>
    %26 = arith.addf %24, %25 : vector<8x8xf32>
    %c0_9 = arith.constant 0 : index
    %c0_10 = arith.constant 0 : index
    %27 = vector.load %arg4[%c0_9, %c0_10] : memref<8x1xf32, #tpu.memory_space<vmem>>, vector<8x1xf32>
    %28 = vector.broadcast %27 : vector<8x1xf32> to vector<8x8xf32>
    %29 = arith.addf %28, %26 : vector<8x8xf32>
    %cst_11 = arith.constant 2.000000e+00 : f32
    %30 = vector.broadcast %cst_11 : f32 to vector<8x8xf32>
    %31 = arith.mulf %30, %17 : vector<8x8xf32>
    %32 = arith.subf %29, %31 : vector<8x8xf32>
    %cst_12 = arith.constant 0.000000e+00 : f32
    %33 = vector.broadcast %cst_12 : f32 to vector<8x8xf32>
    %34 = arith.maximumf %32, %33 : vector<8x8xf32>
    %35 = vector.extract_strided_slice %34 {offsets = [0, 0], sizes = [3, 8], strides = [1, 1]} : vector<8x8xf32> to vector<3x8xf32>
    %cst_13 = arith.constant 1.000000e+00 : f32
    %36 = vector.broadcast %cst_13 : f32 to vector<3x8xf32>
    %37 = arith.addf %36, %35 : vector<3x8xf32>
    %cst_14 = arith.constant 1.000000e+00 : f32
    %38 = vector.broadcast %cst_14 : f32 to vector<3x8xf32>
    %39 = arith.divf %38, %37 : vector<3x8xf32>
    %cst_15 = arith.constant dense<0.000000e+00> : vector<8xf32>
    %40 = vector.multi_reduction <add>, %39, %cst_15 [0] : vector<3x8xf32> to vector<8xf32>
    %41 = vector.shape_cast %40 : vector<8xf32> to vector<1x8xf32>
    %42 = vector.broadcast %41 : vector<1x8xf32> to vector<3x8xf32>
    %43 = arith.divf %39, %42 : vector<3x8xf32>
    %c0_16 = arith.constant 0 : index
    %c0_17 = arith.constant 0 : index
    %44 = vector.load %arg5[%c0_16, %c0_17] : memref<3x8xf32, #tpu.memory_space<vmem>>, vector<3x8xf32>
    tpu.vector_store %arg5[%c0_16, %c0_17], %43 {strides = array<i32>} : memref<3x8xf32, #tpu.memory_space<vmem>>, vector<3x8xf32>,
    %c1_i32 = arith.constant 1 : i32
    %45 = arith.muli %arg0, %c1_i32 : i32
    %46 = arith.addi %45, %arg1 : i32
    %c0_i32_18 = arith.constant 0 : i32
    %47 = arith.minsi %46, %c0_i32_18 : i32
    %c8_i32 = arith.constant 8 : i32
    %48 = arith.muli %47, %c8_i32 : i32
    %49 = tpu.iota {dimensions = array<i32: 1>} : vector<1x8xi32>
    %50 = vector.broadcast %48 : i32 to vector<1x8xi32>
    %51 = arith.addi %50, %49 : vector<1x8xi32>
    %c8_i32_19 = arith.constant 8 : i32
    %52 = vector.broadcast %c8_i32_19 : i32 to vector<1x8xi32>
    %53 = arith.cmpi slt, %51, %52 : vector<1x8xi32>
    %c1_i32_20 = arith.constant 1 : i32
    %54 = arith.cmpi slt, %46, %c1_i32_20 : i32
    %55 = vector.broadcast %54 : i1 to vector<1x8xi1>
    %56 = arith.andi %53, %55 : vector<1x8xi1>
    %c0_21 = arith.constant 0 : index
    %c0_22 = arith.constant 0 : index
    %c0_23 = arith.constant 0 : index
    %57 = vector.load %arg6[%c0_21, %c0_22, %c0_23] : memref<1x3x1xf32, #tpu.memory_space<vmem>>, vector<1x3x1xf32>
    %cst_24 = arith.constant 0.000000e+00 : f32
    %58 = vector.shape_cast %56 : vector<1x8xi1> to vector<1x8xi1>
    %59 = vector.broadcast %58 : vector<1x8xi1> to vector<3x8xi1>
    %60 = vector.broadcast %cst_24 : f32 to vector<3x8xf32>
    %61 = arith.select %59, %43, %60 : vector<3x8xi1>, vector<3x8xf32>
    %cst_25 = arith.constant dense<0.000000e+00> : vector<3xf32>
    %62 = vector.multi_reduction <add>, %61, %cst_25 [1] : vector<3x8xf32> to vector<3xf32>
    %63 = vector.shape_cast %62 : vector<3xf32> to vector<3x1xf32>
    %64 = vector.shape_cast %63 : vector<3x1xf32> to vector<1x3x1xf32>
    %65 = arith.addf %57, %64 : vector<1x3x1xf32>
    %c0_26 = arith.constant 0 : index
    %c0_27 = arith.constant 0 : index
    %c0_28 = arith.constant 0 : index
    %66 = vector.load %arg6[%c0_26, %c0_27, %c0_28] : memref<1x3x1xf32, #tpu.memory_space<vmem>>, vector<1x3x1xf32>
    tpu.vector_store %arg6[%c0_26, %c0_27, %c0_28], %65 {strides = array<i32>} : memref<1x3x1xf32, #tpu.memory_space<vmem>>, vector<1x3x1xf32>,
    return
  }
  func.func @transform_0(%arg0: i32, %arg1: i32) -> (i32, i32) {
    %c1_i32 = arith.constant 1 : i32
    %0 = arith.muli %arg0, %c1_i32 : i32
    %1 = arith.addi %0, %arg1 : i32
    %c0_i32 = arith.constant 0 : i32
    %2 = arith.minsi %1, %c0_i32 : i32
    %c0_i32_0 = arith.constant 0 : i32
    %c0_i32_1 = arith.constant 0 : i32
    return %2, %c0_i32_0 : i32, i32
  }
  func.func @transform_1(%arg0: i32, %arg1: i32) -> (i32, i32) {
    %c0_i32 = arith.constant 0 : i32
    %c0_i32_0 = arith.constant 0 : i32
    %c0_i32_1 = arith.constant 0 : i32
    return %c0_i32, %c0_i32_0 : i32, i32
  }
  func.func @transform_2(%arg0: i32, %arg1: i32) -> (i32, i32) {
    %c0_i32 = arith.constant 0 : i32
    %c0_i32_0 = arith.constant 0 : i32
    %c0_i32_1 = arith.constant 0 : i32
    return %c0_i32, %c0_i32_0 : i32, i32
  }
  func.func @transform_3(%arg0: i32, %arg1: i32) -> (i32, i32) {
    %c1_i32 = arith.constant 1 : i32
    %0 = arith.muli %arg0, %c1_i32 : i32
    %1 = arith.addi %0, %arg1 : i32
    %c0_i32 = arith.constant 0 : i32
    %2 = arith.minsi %1, %c0_i32 : i32
    %c0_i32_0 = arith.constant 0 : i32
    %c0_i32_1 = arith.constant 0 : i32
    return %c0_i32_0, %2 : i32, i32
  }
  func.func @transform_4(%arg0: i32, %arg1: i32) -> (i32, i32, i32) {
    %c0_i32 = arith.constant 0 : i32
    %c0_i32_0 = arith.constant 0 : i32
    %c0_i32_1 = arith.constant 0 : i32
    return %arg0, %c0_i32, %c0_i32_0 : i32, i32, i32
  }
}

</mosaic_0001>

<llo_original>
// kernel: tpu_custom_call.1
$region0: #{tpu_custom_call.1}
  #allocation0 [shape = 'u32[]', space=smem, size = 0x4, offset = 0x4, fixed_abs, tag = 'smem constant byte address 0x4 - core index']
  #allocation1 [shape = 'u32[72,128]{1,0:T(1,128)}', space=vmem, size = 0x9000, scoped, tag = 'internal scratch']
  %s0 = inlined_call_operand.vmem [shape: f32[8,32], index: 0, kind: input, shape index: {}]
  %s1 = inlined_call_operand.hbm [shape: f32[8,32], index: 1, kind: input, shape index: {}]
  %s2 = inlined_call_operand.vmem [shape: f32[8,1], index: 2, kind: input, shape index: {}]
  %s3 = inlined_call_operand.hbm [shape: f32[3,8], index: 3, kind: output, shape index: {0}]
  %s4 = inlined_call_operand.vmem [shape: f32[1,3,1], index: 4, kind: output, shape index: {1}]
  %5 = xla_tuple %s3, %s4
  %s6 = sld [smem:[#allocation0]]
  $region38: #{tpu_custom_call.1} parent=0
    _
  %s8 = ssub.s32 1, %s6
  %s9 = scalar_select 0, %s8, %s6
  $region1: #{tpu_custom_call.1} parent=0
    #allocation2 [shape = 'u8[4096]{0}', space=vmem, size = 0x1000, scoped, tag = 'input window, operand 1, single buffered']
    #allocation3 [shape = 's32[1]{0}', space=sflag, size = 0x4, scoped, tag = 'scoped memory for tpu_custom_call.1']
    #allocation4 [shape = 's32[1]{0}', space=sflag, size = 0x4, scoped, tag = 'scoped memory for tpu_custom_call.1']
    #allocation5 [shape = 'u8[2048]{0}', space=vmem, size = 0x800, scoped, tag = 'output window, operand 0, single buffered']
    %10 = vsyncpa [#allocation3], 0
    %11 = vsyncpa [#allocation4], 0
    // Predicated region
    $region2: #{tpu_custom_call.1} parent=1 // pred_check
      _
    $region3: #{tpu_custom_call.1} parent=1 // pred_check_branch
      %13 = sbr.rel (0) target = $region5
    $region4: #{tpu_custom_call.1} parent=1 // pred_region
      %s14 = sadd.s32 0, 0
      %p15 = scmp.lt.s32.totalorder %s14, 0
      %s16 = scalar_select %p15, %s14, 0
      %p17 = scmp.lt.s32.totalorder %s16, 0
      %s18 = scalar_select %p17, %s16, 0
      %s19 = smul.addr %s18, 8
      %s20 = scalar_lea.vmem %s0, %s19
      %s21 = sadd.s32 0, 0
      %p22 = scmp.lt.s32.totalorder %s21, 0
      %s23 = scalar_select %p22, %s21, 0
    $region5: #{tpu_custom_call.1} parent=1 // pred_fallthru
      _
    // Predicated region
    $region6: #{tpu_custom_call.1} parent=1 // pred_check
      _
    $region7: #{tpu_custom_call.1} parent=1 // pred_check_branch
      %25 = sbr.rel (0) target = $region9
    $region8: #{tpu_custom_call.1} parent=1 // pred_region
      %27 = vsyncadd [#allocation3], 0
      %s29 = sshll.u32 %s1, 4
      %s30 = int_to_ptr.hbm [resolvable:$true] %s29
      %s31 = sshll.u32 [#allocation2], 4
      %s32 = int_to_ptr.vmem [resolvable:$true] %s31
      %34 = dma.hbm_to_vmem [thread:$0]  %s30, 128, %s32, [#allocation3]
    $region9: #{tpu_custom_call.1} parent=1 // pred_fallthru
      _
    // Predicated region
    $region10: #{tpu_custom_call.1} parent=1 // pred_check
      _
    $region11: #{tpu_custom_call.1} parent=1 // pred_check_branch
      %36 = sbr.rel (0) target = $region13
    $region12: #{tpu_custom_call.1} parent=1 // pred_region
      _
    $region13: #{tpu_custom_call.1} parent=1 // pred_fallthru
      _
    // Predicated region
    $region14: #{tpu_custom_call.1} parent=1 // pred_check
      _
    $region15: #{tpu_custom_call.1} parent=1 // pred_check_branch
      %38 = sbr.rel (0) target = $region17
    $region16: #{tpu_custom_call.1} parent=1 // pred_region
      %40 = dma.done [#allocation3], 128
    $region17: #{tpu_custom_call.1} parent=1 // pred_fallthru
      _
    %s41 = sadd.s32 0, 0
    %p42 = scmp.lt.s32.totalorder %s41, 0
    %s43 = scalar_select %p42, %s41, 0
    %p44 = scmp.lt.s32.totalorder %s43, 0
    %s45 = scalar_select %p44, %s43, 0
    %s46 = smul.addr %s45, 8
    %s47 = scalar_lea.vmem %s0, %s46
    %s48 = sadd.s32 0, 0
    %p49 = scmp.lt.s32.totalorder %s48, 0
    %s50 = scalar_select %p49, %s48, 0
    %p51 = scmp.lt.s32.totalorder %s50, 0
    %s52 = scalar_select %p51, %s50, 0
    %s53 = smul.addr %s52, 8
    %s54 = scalar_lea.vmem %s0, %s53
    %s55 = sadd.s32 0, 0
    %p56 = scmp.lt.s32.totalorder %s55, 0
    %s57 = scalar_select %p56, %s55, 0
    %s58 = sadd.s32 0, 0
    %p59 = scmp.lt.s32.totalorder %s58, 0
    %s60 = scalar_select %p59, %s58, 0
    %p63 = scmp.eq.s32.totalorder 0, 0
    // Predicated region
    $region18: #{tpu_custom_call.1} parent=1 // pred_check
      %p64 = pneg %p63
    $region19: #{tpu_custom_call.1} parent=1 // pred_check_branch
      %66 = sbr.rel (%p64) target = $region21
    $region20: #{tpu_custom_call.1} parent=1 // pred_region
      %vm67 = vcmask 2048
      %68 = vst.msk [vmem:[%s4] sm:$0x7] %vm67, 0.0
    $region21: #{tpu_custom_call.1} parent=1 // pred_fallthru
      _
    %v69 = vld [vmem:[%s54] sm:$0xff]
    %v70 = vld [vmem:[#allocation2] sm:$0xff]
    %v71 = vpack.c.bf16 %v69, %v69
    %v72 = vunpack.c.l.bf16 %v71
    %v73 = vsub.f32 %v69, %v72
    %v74 = vpack.c.bf16 %v73, %v73
    %v75 = vpack.c.bf16 %v70, %v70
    %v76 = vunpack.c.l.bf16 %v75
    %v77 = vsub.f32 %v70, %v76
    %v78 = vpack.c.bf16 %v77, %v77
    %vm79 = vcmask 261120
    %v81 = vsel %vm79, %v75, 0
    %v84 = vsel %vm79, %v74, 0
    %86 = vmatpush.bf16.xpose.msra.mxu0 0
    %87 = vmatpush.bf16.xpose.msra.mxu0 0
    %88 = vmatpush.bf16.xpose.msra.mxu0 0
    %89 = vmatpush.bf16.xpose.msra.mxu0 0
    %90 = vmatpush.bf16.xpose.msra.mxu0 0
    %91 = vmatpush.bf16.xpose.msra.mxu0 0
    %92 = vmatpush.bf16.xpose.msra.mxu0 0
    %93 = vmatpush.bf16.xpose.msra.mxu0 %v84
    %94 = vmatmul.bf16.gmra.mxu0 %v81
    %v95 = vpop.f32.mrf.mxu0
    %v96 = vadd.f32 0.0, %v95
    %v97 = vpop.f32.mrf.mxu0
    %98 = vdwg.mxu0
    %v100 = vsel %vm79, %v71, 0
    %102 = vmatpush.bf16.xpose.msra.mxu0 0
    %103 = vmatpush.bf16.xpose.msra.mxu0 0
    %104 = vmatpush.bf16.xpose.msra.mxu0 0
    %105 = vmatpush.bf16.xpose.msra.mxu0 0
    %106 = vmatpush.bf16.xpose.msra.mxu0 0
    %107 = vmatpush.bf16.xpose.msra.mxu0 0
    %108 = vmatpush.bf16.xpose.msra.mxu0 0
    %109 = vmatpush.bf16.xpose.msra.mxu0 %v100
    %110 = vmatmul.bf16.gmra.mxu0 %v81
    %v111 = vpop.f32.mrf.mxu0
    %v112 = vadd.f32 %v96, %v111
    %v113 = vpop.f32.mrf.mxu0
    %114 = vdwg.mxu0
    %v116 = vsel %vm79, %v78, 0
    %118 = vmatpush.bf16.xpose.msra.mxu0 0
    %119 = vmatpush.bf16.xpose.msra.mxu0 0
    %120 = vmatpush.bf16.xpose.msra.mxu0 0
    %121 = vmatpush.bf16.xpose.msra.mxu0 0
    %122 = vmatpush.bf16.xpose.msra.mxu0 0
    %123 = vmatpush.bf16.xpose.msra.mxu0 0
    %124 = vmatpush.bf16.xpose.msra.mxu0 0
    %125 = vmatpush.bf16.xpose.msra.mxu0 %v100
    %126 = vmatmul.bf16.gmra.mxu0 %v116
    %v127 = vpop.f32.mrf.mxu0
    %v128 = vadd.f32 0.0, %v127
    %v129 = vpop.f32.mrf.mxu0
    %130 = vdwg.mxu0
    %v131 = vadd.f32 %v112, %v128
    %v132 = vmul.f32 %v69, %v69
    %v133 = vpack.c.bf16 %v132, %v132
    %v134 = vunpack.c.l.bf16 %v133
    %v135 = vsub.f32 %v132, %v134
    %v136 = vpack.c.bf16 %v135, %v135
    %v138 = vsel %vm79, 1065369472, 0
    %v141 = vsel %vm79, %v136, 0
    %143 = vmatpush.bf16.xpose.msra.mxu0 0
    %144 = vmatpush.bf16.xpose.msra.mxu0 0
    %145 = vmatpush.bf16.xpose.msra.mxu0 0
    %146 = vmatpush.bf16.xpose.msra.mxu0 0
    %147 = vmatpush.bf16.xpose.msra.mxu0 0
    %148 = vmatpush.bf16.xpose.msra.mxu0 0
    %149 = vmatpush.bf16.xpose.msra.mxu0 0
    %150 = vmatpush.bf16.xpose.msra.mxu0 %v141
    %151 = vmatmul.bf16.gmra.mxu0 %v138
    %v152 = vpop.f32.mrf.mxu0
    %v153 = vadd.f32 0.0, %v152
    %v154 = vpop.f32.mrf.mxu0
    %155 = vdwg.mxu0
    %v157 = vsel %vm79, %v133, 0
    %159 = vmatpush.bf16.xpose.msra.mxu0 0
    %160 = vmatpush.bf16.xpose.msra.mxu0 0
    %161 = vmatpush.bf16.xpose.msra.mxu0 0
    %162 = vmatpush.bf16.xpose.msra.mxu0 0
    %163 = vmatpush.bf16.xpose.msra.mxu0 0
    %164 = vmatpush.bf16.xpose.msra.mxu0 0
    %165 = vmatpush.bf16.xpose.msra.mxu0 0
    %166 = vmatpush.bf16.xpose.msra.mxu0 %v157
    %167 = vmatmul.bf16.gmra.mxu0 %v138
    %v168 = vpop.f32.mrf.mxu0
    %v169 = vadd.f32 %v153, %v168
    %v170 = vpop.f32.mrf.mxu0
    %171 = vdwg.mxu0
    %v172 = vld [vmem:[%s2] sm:$0xff]
    %174 = vset.pattern.permute.xlu0 0
    %175 = vperm.xlu0 %174, %v172
    %v176 = vpop.permute.xlu0 %175
    %v178 = vadd.f32 %v176, %v169
    %v179 = vmul.f32 %v131, 2.0
    %v180 = vsub.f32 %v178, %v179
    %v181 = vmax.f32 %v180, 0.0
    %v182 = vadd.f32 %v181, 1.0
    %v183 = vrcp.pop %v182
    %v184 = vmul.f32 %v182, %v183
    %v185 = vsub.f32 1.0, %v184
    %v186 = vmul.f32 %v183, %v185
    %v187 = vadd.f32 %v183, %v186
    %vm188 = vweird.f32 %v182
    %vm189 = vweird.f32 %v183
    %vm190 = vmor %vm188, %vm189
    %v191 = vsel %vm190, %v183, %v187
    %v192 = vand.u32 2147483647, %v182
    %vm193 = vcmp.eq.f32.partialorder %v192, 8.507059e+37
    %v194 = vand.u32 %v182, 2147483648
    %v195 = vor.u32 1.1754944e-38, %v194
    %v196 = vsel %vm193, %v195, %v191
    %v197 = vmul.f32 1.0, %v196
    %vm198 = vcmask 59392
    %v199 = vsel %vm198, %v197, 0.0
    %v200 = vrot.slane %v199, 4
    %v201 = vadd.f32 %v199, %v200
    %v202 = vrot.slane %v201, 2
    %v203 = vadd.f32 %v201, %v202
    %v204 = vrot.slane %v203, 1
    %v205 = vadd.f32 %v203, %v204
    %v206 = vrcp.pop %v205
    %v207 = vmul.f32 %v205, %v206
    %v208 = vsub.f32 1.0, %v207
    %v209 = vmul.f32 %v206, %v208
    %v210 = vadd.f32 %v206, %v209
    %vm211 = vweird.f32 %v205
    %vm212 = vweird.f32 %v206
    %vm213 = vmor %vm211, %vm212
    %v214 = vsel %vm213, %v206, %v210
    %v215 = vand.u32 2147483647, %v205
    %vm216 = vcmp.eq.f32.partialorder %v215, 8.507059e+37
    %v217 = vand.u32 %v205, 2147483648
    %v218 = vor.u32 1.1754944e-38, %v217
    %v219 = vsel %vm216, %v218, %v214
    %v220 = vmul.f32 %v197, %v219
    %221 = vst.msk [vmem:[#allocation5] sm:$0x7] %vm198, %v220
    %s222 = sadd.s32 0, 0
    %p223 = scmp.lt.s32.totalorder %s222, 0
    %s224 = scalar_select %p223, %s222, 0
    %s225 = smul.u32 %s224, 8
    %v226 = vlaneseq
    %v227 = vand.u32 %v226, 127
    %v228 = vstv %s225
    %v229 = vadd.s32 %v228, %v227
    %vm230 = vcmp.lt.s32.totalorder %v229, 8
    %p231 = scmp.lt.s32.totalorder %s222, 1
    %s232 = scalar_select %p231, 1, 0
    %v233 = vstv %s232
    %vm234 = vcmp.eq.s32.totalorder %v233, 1
    %vm235 = vmand %vm230, %vm234
    %v236 = vld [vmem:[%s4] sm:$0x7]
    %v237 = vsel %vm235, 1, 0
    %vm238 = vcmp.eq.s32.totalorder %v237, 1
    %v239 = vsel %vm238, %v220, 0.0
    %v240 = vsel %vm198, %v239, 0.0
    %241 = vadd.xlane.f32.xlu0 %v240
    %v242 = vpop.xlane.xlu0 %241
    %v243 = vadd.f32 %v236, %v242
    %vm244 = vcmask 2048
    %245 = vst.msk [vmem:[%s4] sm:$0x7] %vm244, %v243
    // Predicated region
    $region22: #{tpu_custom_call.1} parent=1 // pred_check
      _
    $region23: #{tpu_custom_call.1} parent=1 // pred_check_branch
      %247 = sbr.rel (0) target = $region25
    $region24: #{tpu_custom_call.1} parent=1 // pred_region
      %s248 = sadd.s32 0, 0
      %p249 = scmp.lt.s32.totalorder %s248, 0
      %s250 = scalar_select %p249, %s248, 0
      %252 = vsyncadd [#allocation4], 0
      %s253 = smul.addr %s250, 4
      %s254 = scalar_lea.hbm %s3, %s253
      %s256 = sshll.u32 [#allocation5], 4
      %s257 = int_to_ptr.vmem [resolvable:$true] %s256
      %s258 = sshll.u32 %s254, 4
      %s259 = int_to_ptr.hbm [resolvable:$true] %s258
      %261 = dma.vmem_to_hbm [thread:$0]  %s257, 64, %s259, [#allocation4]
    $region25: #{tpu_custom_call.1} parent=1 // pred_fallthru
      _
    // Predicated region
    $region26: #{tpu_custom_call.1} parent=1 // pred_check
      _
    $region27: #{tpu_custom_call.1} parent=1 // pred_check_branch
      %263 = sbr.rel (0) target = $region29
    $region28: #{tpu_custom_call.1} parent=1 // pred_region
      _
    $region29: #{tpu_custom_call.1} parent=1 // pred_fallthru
      _
    // Predicated region
    $region30: #{tpu_custom_call.1} parent=1 // pred_check
      _
    $region31: #{tpu_custom_call.1} parent=1 // pred_check_branch
      %265 = sbr.rel (0) target = $region33
    $region32: #{tpu_custom_call.1} parent=1 // pred_region
      %267 = dma.done [#allocation4], 64
    $region33: #{tpu_custom_call.1} parent=1 // pred_fallthru
      _
    // Predicated region
    $region34: #{tpu_custom_call.1} parent=1 // pred_check
      _
    $region35: #{tpu_custom_call.1} parent=1 // pred_check_branch
      %269 = sbr.rel (0) target = $region37
    $region36: #{tpu_custom_call.1} parent=1 // pred_region
      _
    $region37: #{tpu_custom_call.1} parent=1 // pred_fallthru
      _
    %270 = vsyncpa [#allocation3], 1
    %271 = vsyncpa [#allocation4], 1

</llo_original>
